<compile_context>
chip_gen: v6e
topology: v6e:2x2x1
jax: 0.10.0
libtpu: 0.0.40
codegen_flags: <defaults>
</compile_context>

<pallas_src>
import jax
import jax.numpy as jnp
from jax import lax
from jax.experimental import pallas as pl
from jax.experimental.pallas import tpu as pltpu


def _round_up(x, m):
    return ((x + m - 1) // m) * m


def _linear_kernel(x_ref, w_ref, b_ref, o_ref):
    # grid = (batch tiles [parallel], K tiles [arbitrary / reduction])
    k = pl.program_id(1)

    # x_ref: (tm, tk) bf16; w_ref: (C_pad, tk) bf16 (PyTorch (out, in) layout).
    # Contract on dim 1 of both -> x @ w.T, f32 accumulation on the MXU.
    partial = lax.dot_general(
        x_ref[...],
        w_ref[...],
        dimension_numbers=(((1,), (1,)), ((), ())),
        preferred_element_type=jnp.float32,
    )

    @pl.when(k == 0)
    def _():
        # Initialize the resident f32 output block with bias + first partial.
        o_ref[...] = partial + b_ref[...]

    @pl.when(k > 0)
    def _():
        o_ref[...] += partial


def classifier_forward(x, w, b, *, compute_dtype=jnp.bfloat16,
                       tk_max=2048, tm_max=128):
    """Pallas equivalent of Classifier.forward: flatten -> nn.Linear.

    x: (B, ...) float32  — any trailing shape, flattened per-sample (nn.Flatten)
    w: (num_classes, input_dim) float32  — PyTorch nn.Linear weight layout
    b: (num_classes,) float32
    returns: (B, num_classes) float32
    """
    B = x.shape[0]
    x_flat = x.reshape(B, -1)                 # glue: nn.Flatten
    D = x_flat.shape[1]
    C = w.shape[0]

    # Lane-dense output: pad num_classes up to a multiple of 128.
    C_pad = _round_up(C, 128)

    # Batch tiling: pad to sublane multiple; tile by 128 when large so the
    # leading grid axis is a real "parallel" axis (v7x second TensorCore).
    if B <= tm_max:
        B_pad = _round_up(B, 8)
        tm = B_pad
    else:
        tm = tm_max
        B_pad = _round_up(B, tm)

    # Reduction tiling: collapse the K grid when D fits comfortably in VMEM,
    # otherwise use 512-deep tiles (multiple of 256 for v6e/v7x MXU) and pad.
    if D <= tk_max:
        tk = D
        D_pad = D
    else:
        tk = 512
        D_pad = _round_up(D, tk)
    # VMEM budget note: double-buffered weight tile = 2*C_pad*tk*2B; with the
    # caps above this stays well under the 32 MiB scoped default on v5e/v6e/v7x.

    # Zero-padding is exact for the matmul; padded rows/lanes are sliced off.
    xp = x_flat
    if (B_pad, D_pad) != (B, D):
        xp = jnp.pad(x_flat, ((0, B_pad - B), (0, D_pad - D)))
    wp = w
    if (C_pad, D_pad) != (C, D):
        wp = jnp.pad(w, ((0, C_pad - C), (0, D_pad - D)))
    bp = b if C_pad == C else jnp.pad(b, (0, C_pad - C))
    bp = bp.reshape(1, C_pad).astype(jnp.float32)

    # Deliberate bf16 cast of the operands (f32 accumulate in the kernel).
    xp = xp.astype(compute_dtype)
    wp = wp.astype(compute_dtype)

    grid = (B_pad // tm, D_pad // tk)

    out_padded = pl.pallas_call(
        _linear_kernel,
        out_shape=jax.ShapeDtypeStruct((B_pad, C_pad), jnp.float32),
        grid_spec=pltpu.PrefetchScalarGridSpec(
            num_scalar_prefetch=0,
            grid=grid,
            in_specs=[
                pl.BlockSpec((tm, tk), lambda i, k: (i, k)),     # x tile
                pl.BlockSpec((C_pad, tk), lambda i, k: (0, k)),  # w tile (C, D)
                pl.BlockSpec((1, C_pad), lambda i, k: (0, 0)),   # bias, resident
            ],
            out_specs=pl.BlockSpec((tm, C_pad), lambda i, k: (i, 0)),
        ),
        compiler_params=pltpu.CompilerParams(
            dimension_semantics=("parallel", "arbitrary"),
        ),
    )(xp, wp, bp)

    return out_padded[:B, :C]


if __name__ == "__main__":
    key = jax.random.PRNGKey(0)
    kx, kw, kb = jax.random.split(key, 3)

    # Small shapes consistent with the module: input (B, C, H, W) flattened
    # into input_dim = 4*16*16 = 1024, num_classes = 10.
    B, Cin, H, W = 2, 4, 16, 16
    input_dim = Cin * H * W
    num_classes = 10

    x = jax.random.normal(kx, (B, Cin, H, W), dtype=jnp.float32)
    bound = 1.0 / (input_dim ** 0.5)
    w = jax.random.uniform(kw, (num_classes, input_dim),
                           minval=-bound, maxval=bound, dtype=jnp.float32)
    b = jax.random.uniform(kb, (num_classes,),
                           minval=-bound, maxval=bound, dtype=jnp.float32)

    out = classifier_forward(x, w, b)
    jax.block_until_ready(out)
    assert out.shape == (B, num_classes)

    # Tight check against a reference using the same bf16 operand quantization
    # (validates the kernel's matmul/bias/accumulation itself).
    xq = x.reshape(B, -1).astype(jnp.bfloat16).astype(jnp.float32)
    wq = w.astype(jnp.bfloat16).astype(jnp.float32)
    ref_q = xq @ wq.T + b
    assert jnp.allclose(out, ref_q, atol=1e-4, rtol=1e-4)

    # Loose check against the full-f32 module semantics (bf16 operand rounding).
    ref_f32 = x.reshape(B, -1) @ w.T + b
    assert jnp.allclose(out, ref_f32, atol=3e-2, rtol=3e-2)

    print("KERNEL_OK")
</pallas_src>

<mosaic_0001>
module attributes {stable_mosaic.version = 11 : i64} {
  func.func @_linear_kernel(%arg0: i32, %arg1: i32, %arg2: memref<8x1024xbf16, #tpu.memory_space<vmem>>, %arg3: memref<128x1024xbf16, #tpu.memory_space<vmem>>, %arg4: memref<1x128xf32, #tpu.memory_space<vmem>>, %arg5: memref<8x128xf32, #tpu.memory_space<vmem>>) attributes {dimension_semantics = [#tpu.dimension_semantics<parallel>, #tpu.dimension_semantics<arbitrary>], iteration_bounds = array<i64: 1, 1>, scalar_prefetch = 0 : i64, scratch_operands = 0 : i64, tpu.core_type = #tpu.core_type<tc>, window_params = [{transform_indices = @transform_0, window_bounds = array<i64: 8, 1024>}, {transform_indices = @transform_1, window_bounds = array<i64: 128, 1024>}, {pipeline_mode = #tpu.pipeline_mode<synchronous>, transform_indices = @transform_2, window_bounds = array<i64: 1, 128>}, {transform_indices = @transform_3, window_bounds = array<i64: 8, 128>}]} {
    %c0 = arith.constant 0 : index
    %c0_0 = arith.constant 0 : index
    %0 = vector.load %arg2[%c0, %c0_0] : memref<8x1024xbf16, #tpu.memory_space<vmem>>, vector<8x1024xbf16>
    %c0_1 = arith.constant 0 : index
    %c0_2 = arith.constant 0 : index
    %1 = vector.load %arg3[%c0_1, %c0_2] : memref<128x1024xbf16, #tpu.memory_space<vmem>>, vector<128x1024xbf16>
    %cst = arith.constant dense<0.000000e+00> : vector<8x128xf32>
    %2 = tpu.matmul %0, %1, %cst {dimension_numbers = #tpu.dot_dimension_numbers<[1], [1], [0], [0], [0, 0, 1, 0], [], []>} : vector<8x1024xbf16>, vector<128x1024xbf16>, vector<8x128xf32> -> vector<8x128xf32>
    %c0_i32 = arith.constant 0 : i32
    %3 = arith.cmpi eq, %arg1, %c0_i32 : i32
    %4 = arith.extui %3 : i1 to i32
    %c0_i32_3 = arith.constant 0 : i32
    %5 = arith.cmpi ne, %4, %c0_i32_3 : i32
    scf.if %5 {
      %c0_6 = arith.constant 0 : index
      %c0_7 = arith.constant 0 : index
      %9 = vector.load %arg4[%c0_6, %c0_7] : memref<1x128xf32, #tpu.memory_space<vmem>>, vector<1x128xf32>
      %10 = vector.broadcast %9 : vector<1x128xf32> to vector<8x128xf32>
      %11 = arith.addf %2, %10 : vector<8x128xf32>
      %c0_8 = arith.constant 0 : index
      %c0_9 = arith.constant 0 : index
      %12 = vector.load %arg5[%c0_8, %c0_9] : memref<8x128xf32, #tpu.memory_space<vmem>>, vector<8x128xf32>
      tpu.vector_store %arg5[%c0_8, %c0_9], %11 {strides = array<i32>} : memref<8x128xf32, #tpu.memory_space<vmem>>, vector<8x128xf32>,
    } else {
    }
    %c0_i32_4 = arith.constant 0 : i32
    %6 = arith.cmpi sgt, %arg1, %c0_i32_4 : i32
    %7 = arith.extui %6 : i1 to i32
    %c0_i32_5 = arith.constant 0 : i32
    %8 = arith.cmpi ne, %7, %c0_i32_5 : i32
    scf.if %8 {
      %c0_6 = arith.constant 0 : index
      %c0_7 = arith.constant 0 : index
      %9 = vector.load %arg5[%c0_6, %c0_7] : memref<8x128xf32, #tpu.memory_space<vmem>>, vector<8x128xf32>
      %10 = arith.addf %9, %2 : vector<8x128xf32>
      %c0_8 = arith.constant 0 : index
      %c0_9 = arith.constant 0 : index
      %11 = vector.load %arg5[%c0_8, %c0_9] : memref<8x128xf32, #tpu.memory_space<vmem>>, vector<8x128xf32>
      tpu.vector_store %arg5[%c0_8, %c0_9], %10 {strides = array<i32>} : memref<8x128xf32, #tpu.memory_space<vmem>>, vector<8x128xf32>,
    } else {
    }
    return
  }
  func.func @transform_0(%arg0: i32, %arg1: i32) -> (i32, i32) {
    %c0_i32 = arith.constant 0 : i32
    return %arg0, %arg1 : i32, i32
  }
  func.func @transform_1(%arg0: i32, %arg1: i32) -> (i32, i32) {
    %c0_i32 = arith.constant 0 : i32
    %c0_i32_0 = arith.constant 0 : i32
    return %c0_i32, %arg1 : i32, i32
  }
  func.func @transform_2(%arg0: i32, %arg1: i32) -> (i32, i32) {
    %c0_i32 = arith.constant 0 : i32
    %c0_i32_0 = arith.constant 0 : i32
    %c0_i32_1 = arith.constant 0 : i32
    return %c0_i32, %c0_i32_0 : i32, i32
  }
  func.func @transform_3(%arg0: i32, %arg1: i32) -> (i32, i32) {
    %c0_i32 = arith.constant 0 : i32
    %c0_i32_0 = arith.constant 0 : i32
    return %arg0, %c0_i32 : i32, i32
  }
}

</mosaic_0001>

<llo_original>
// kernel: tpu_custom_call.1
$region0: #{tpu_custom_call.1}
  #allocation0 [shape = 'u32[]', space=smem, size = 0x4, offset = 0x4, fixed_abs, tag = 'smem constant byte address 0x4 - core index']
  #allocation1 [shape = 'u32[144,128]{1,0:T(1,128)}', space=vmem, size = 0x12000, scoped, tag = 'internal scratch']
  %s0 = inlined_call_operand.hbm [shape: bf16[8,1024], index: 0, kind: input, shape index: {}]
  %s1 = inlined_call_operand.hbm [shape: bf16[128,1024], index: 1, kind: input, shape index: {}]
  %s2 = inlined_call_operand.vmem [shape: f32[1,128], index: 2, kind: input, shape index: {}]
  %s3 = inlined_call_operand.hbm [shape: f32[8,128], index: 3, kind: output, shape index: {}]
  %s4 = sld [smem:[#allocation0]]
  $region38: #{tpu_custom_call.1} parent=0
    _
  %s6 = ssub.s32 1, %s4
  %s7 = scalar_select 0, %s6, %s4
  $region1: #{tpu_custom_call.1} parent=0
    #allocation2 [shape = 'u8[16384]{0}', space=vmem, size = 0x4000, scoped, tag = 'input window, operand 0, single buffered']
    #allocation3 [shape = 's32[1]{0}', space=sflag, size = 0x4, scoped, tag = 'scoped memory for tpu_custom_call.1']
    #allocation4 [shape = 's32[1]{0}', space=sflag, size = 0x4, scoped, tag = 'scoped memory for tpu_custom_call.1']
    #allocation5 [shape = 'u8[262144]{0}', space=vmem, size = 0x40000, scoped, tag = 'input window, operand 1, single buffered']
    #allocation6 [shape = 's32[1]{0}', space=sflag, size = 0x4, scoped, tag = 'scoped memory for tpu_custom_call.1']
    #allocation7 [shape = 'u8[4096]{0}', space=vmem, size = 0x1000, scoped, tag = 'output window, operand 0, single buffered']
    %8 = vsyncpa [#allocation3], 0
    %9 = vsyncpa [#allocation6], 0
    %10 = vsyncpa [#allocation4], 0
    // Predicated region
    $region2: #{tpu_custom_call.1} parent=1 // pred_check
      _
    $region3: #{tpu_custom_call.1} parent=1 // pred_check_branch
      %12 = sbr.rel (0) target = $region5
    $region4: #{tpu_custom_call.1} parent=1 // pred_region
      %s14 = ssub.s32 512, 512
      %15 = vsyncadd [#allocation3], %s14
      %s17 = sshll.u32 [#allocation2], 4
      %s18 = int_to_ptr.vmem [resolvable:$true] %s17
      %20 = dma.hbm_to_vmem [thread:$0]  %s0, 512, %s18, [#allocation3]
    $region5: #{tpu_custom_call.1} parent=1 // pred_fallthru
      _
    // Predicated region
    $region6: #{tpu_custom_call.1} parent=1 // pred_check
      _
    $region7: #{tpu_custom_call.1} parent=1 // pred_check_branch
      %22 = sbr.rel (0) target = $region9
    $region8: #{tpu_custom_call.1} parent=1 // pred_region
      %s24 = ssub.s32 8192, 8192
      %25 = vsyncadd [#allocation6], %s24
      %s26 = sshll.u32 [#allocation5], 4
      %s27 = int_to_ptr.vmem [resolvable:$true] %s26
      %32 = dma.hbm_to_vmem [thread:$0]  %s1, 8192, %s27, [#allocation6], 512, 512, 32
    $region9: #{tpu_custom_call.1} parent=1 // pred_fallthru
      _
    // Predicated region
    $region10: #{tpu_custom_call.1} parent=1 // pred_check
      _
    $region11: #{tpu_custom_call.1} parent=1 // pred_check_branch
      %34 = sbr.rel (0) target = $region13
    $region12: #{tpu_custom_call.1} parent=1 // pred_region
      _
    $region13: #{tpu_custom_call.1} parent=1 // pred_fallthru
      _
    // Predicated region
    $region14: #{tpu_custom_call.1} parent=1 // pred_check
      _
    $region15: #{tpu_custom_call.1} parent=1 // pred_check_branch
      %36 = sbr.rel (0) target = $region17
    $region16: #{tpu_custom_call.1} parent=1 // pred_region
      %37 = dma.done [#allocation3], 512
    $region17: #{tpu_custom_call.1} parent=1 // pred_fallthru
      _
    // Predicated region
    $region18: #{tpu_custom_call.1} parent=1 // pred_check
      _
    $region19: #{tpu_custom_call.1} parent=1 // pred_check_branch
      %39 = sbr.rel (0) target = $region21
    $region20: #{tpu_custom_call.1} parent=1 // pred_region
      %40 = dma.done [#allocation6], 8192
    $region21: #{tpu_custom_call.1} parent=1 // pred_fallthru
      _
    %v42 = vld [vmem:[#allocation2] sm:$0xff]
    %v43 = vld [vmem:[#allocation2 + $0x8] sm:$0xff]
    %v44 = vld [vmem:[#allocation2 + $0x10] sm:$0xff]
    %v45 = vld [vmem:[#allocation2 + $0x18] sm:$0xff]
    %v46 = vld [vmem:[#allocation5] sm:$0xff]
    %v47 = vld [vmem:[#allocation5 + $0x8] sm:$0xff]
    %v48 = vld [vmem:[#allocation5 + $0x10] sm:$0xff]
    %v49 = vld [vmem:[#allocation5 + $0x18] sm:$0xff]
    %v50 = vld [vmem:[#allocation5 + $0x20] sm:$0xff]
    %v51 = vld [vmem:[#allocation5 + $0x28] sm:$0xff]
    %v52 = vld [vmem:[#allocation5 + $0x30] sm:$0xff]
    %v53 = vld [vmem:[#allocation5 + $0x38] sm:$0xff]
    %v54 = vld [vmem:[#allocation5 + $0x40] sm:$0xff]
    %v55 = vld [vmem:[#allocation5 + $0x48] sm:$0xff]
    %v56 = vld [vmem:[#allocation5 + $0x50] sm:$0xff]
    %v57 = vld [vmem:[#allocation5 + $0x58] sm:$0xff]
    %v58 = vld [vmem:[#allocation5 + $0x60] sm:$0xff]
    %v59 = vld [vmem:[#allocation5 + $0x68] sm:$0xff]
    %v60 = vld [vmem:[#allocation5 + $0x70] sm:$0xff]
    %v61 = vld [vmem:[#allocation5 + $0x78] sm:$0xff]
    %v62 = vld [vmem:[#allocation5 + $0x80] sm:$0xff]
    %v63 = vld [vmem:[#allocation5 + $0x88] sm:$0xff]
    %v64 = vld [vmem:[#allocation5 + $0x90] sm:$0xff]
    %v65 = vld [vmem:[#allocation5 + $0x98] sm:$0xff]
    %v66 = vld [vmem:[#allocation5 + $0xa0] sm:$0xff]
    %v67 = vld [vmem:[#allocation5 + $0xa8] sm:$0xff]
    %v68 = vld [vmem:[#allocation5 + $0xb0] sm:$0xff]
    %v69 = vld [vmem:[#allocation5 + $0xb8] sm:$0xff]
    %v70 = vld [vmem:[#allocation5 + $0xc0] sm:$0xff]
    %v71 = vld [vmem:[#allocation5 + $0xc8] sm:$0xff]
    %v72 = vld [vmem:[#allocation5 + $0xd0] sm:$0xff]
    %v73 = vld [vmem:[#allocation5 + $0xd8] sm:$0xff]
    %v74 = vld [vmem:[#allocation5 + $0xe0] sm:$0xff]
    %v75 = vld [vmem:[#allocation5 + $0xe8] sm:$0xff]
    %v76 = vld [vmem:[#allocation5 + $0xf0] sm:$0xff]
    %v77 = vld [vmem:[#allocation5 + $0xf8] sm:$0xff]
    %v78 = vld [vmem:[#allocation5 + $0x100] sm:$0xff]
    %v79 = vld [vmem:[#allocation5 + $0x108] sm:$0xff]
    %v80 = vld [vmem:[#allocation5 + $0x110] sm:$0xff]
    %v81 = vld [vmem:[#allocation5 + $0x118] sm:$0xff]
    %v82 = vld [vmem:[#allocation5 + $0x120] sm:$0xff]
    %v83 = vld [vmem:[#allocation5 + $0x128] sm:$0xff]
    %v84 = vld [vmem:[#allocation5 + $0x130] sm:$0xff]
    %v85 = vld [vmem:[#allocation5 + $0x138] sm:$0xff]
    %v86 = vld [vmem:[#allocation5 + $0x140] sm:$0xff]
    %v87 = vld [vmem:[#allocation5 + $0x148] sm:$0xff]
    %v88 = vld [vmem:[#allocation5 + $0x150] sm:$0xff]
    %v89 = vld [vmem:[#allocation5 + $0x158] sm:$0xff]
    %v90 = vld [vmem:[#allocation5 + $0x160] sm:$0xff]
    %v91 = vld [vmem:[#allocation5 + $0x168] sm:$0xff]
    %v92 = vld [vmem:[#allocation5 + $0x170] sm:$0xff]
    %v93 = vld [vmem:[#allocation5 + $0x178] sm:$0xff]
    %v94 = vld [vmem:[#allocation5 + $0x180] sm:$0xff]
    %v95 = vld [vmem:[#allocation5 + $0x188] sm:$0xff]
    %v96 = vld [vmem:[#allocation5 + $0x190] sm:$0xff]
    %v97 = vld [vmem:[#allocation5 + $0x198] sm:$0xff]
    %v98 = vld [vmem:[#allocation5 + $0x1a0] sm:$0xff]
    %v99 = vld [vmem:[#allocation5 + $0x1a8] sm:$0xff]
    %v100 = vld [vmem:[#allocation5 + $0x1b0] sm:$0xff]
    %v101 = vld [vmem:[#allocation5 + $0x1b8] sm:$0xff]
    %v102 = vld [vmem:[#allocation5 + $0x1c0] sm:$0xff]
    %v103 = vld [vmem:[#allocation5 + $0x1c8] sm:$0xff]
    %v104 = vld [vmem:[#allocation5 + $0x1d0] sm:$0xff]
    %v105 = vld [vmem:[#allocation5 + $0x1d8] sm:$0xff]
    %v106 = vld [vmem:[#allocation5 + $0x1e0] sm:$0xff]
    %v107 = vld [vmem:[#allocation5 + $0x1e8] sm:$0xff]
    %v108 = vld [vmem:[#allocation5 + $0x1f0] sm:$0xff]
    %v109 = vld [vmem:[#allocation5 + $0x1f8] sm:$0xff]
    %v114 = vunpack.c.l.b16 %v42
    %v115 = vunpack.c.h.b16 %v42
    %v116 = vunpack.c.l.b16 %v43
    %v117 = vunpack.c.h.b16 %v43
    %v118 = vunpack.c.l.b16 %v44
    %v119 = vunpack.c.h.b16 %v44
    %v120 = vunpack.c.l.b16 %v45
    %v121 = vunpack.c.h.b16 %v45
    %v122 = vpack.c.b16 %v114, %v114
    %v123 = vpack.c.b16 %v115, %v115
    %v124 = vpack.c.b16 %v116, %v116
    %v125 = vpack.c.b16 %v117, %v117
    %v126 = vpack.c.b16 %v118, %v118
    %v127 = vpack.c.b16 %v119, %v119
    %v128 = vpack.c.b16 %v120, %v120
    %v129 = vpack.c.b16 %v121, %v121
    %v202 = vunpack.c.l.b16 %v46
    %v203 = vunpack.c.h.b16 %v46
    %v204 = vunpack.c.l.b16 %v47
    %v205 = vunpack.c.h.b16 %v47
    %v206 = vunpack.c.l.b16 %v48
    %v207 = vunpack.c.h.b16 %v48
    %v208 = vunpack.c.l.b16 %v49
    %v209 = vunpack.c.h.b16 %v49
    %v210 = vunpack.c.l.b16 %v50
    %v211 = vunpack.c.h.b16 %v50
    %v212 = vunpack.c.l.b16 %v51
    %v213 = vunpack.c.h.b16 %v51
    %v214 = vunpack.c.l.b16 %v52
    %v215 = vunpack.c.h.b16 %v52
    %v216 = vunpack.c.l.b16 %v53
    %v217 = vunpack.c.h.b16 %v53
    %v218 = vunpack.c.l.b16 %v54
    %v219 = vunpack.c.h.b16 %v54
    %v220 = vunpack.c.l.b16 %v55
    %v221 = vunpack.c.h.b16 %v55
    %v222 = vunpack.c.l.b16 %v56
    %v223 = vunpack.c.h.b16 %v56
    %v224 = vunpack.c.l.b16 %v57
    %v225 = vunpack.c.h.b16 %v57
    %v226 = vunpack.c.l.b16 %v58
    %v227 = vunpack.c.h.b16 %v58
    %v228 = vunpack.c.l.b16 %v59
    %v229 = vunpack.c.h.b16 %v59
    %v230 = vunpack.c.l.b16 %v60
    %v231 = vunpack.c.h.b16 %v60
    %v232 = vunpack.c.l.b16 %v61
    %v233 = vunpack.c.h.b16 %v61
    %v234 = vunpack.c.l.b16 %v62
    %v235 = vunpack.c.h.b16 %v62
    %v236 = vunpack.c.l.b16 %v63
    %v237 = vunpack.c.h.b16 %v63
    %v238 = vunpack.c.l.b16 %v64
    %v239 = vunpack.c.h.b16 %v64
    %v240 = vunpack.c.l.b16 %v65
    %v241 = vunpack.c.h.b16 %v65
    %v242 = vunpack.c.l.b16 %v66
    %v243 = vunpack.c.h.b16 %v66
    %v244 = vunpack.c.l.b16 %v67
    %v245 = vunpack.c.h.b16 %v67
    %v246 = vunpack.c.l.b16 %v68
    %v247 = vunpack.c.h.b16 %v68
    %v248 = vunpack.c.l.b16 %v69
    %v249 = vunpack.c.h.b16 %v69
    %v250 = vunpack.c.l.b16 %v70
    %v251 = vunpack.c.h.b16 %v70
    %v252 = vunpack.c.l.b16 %v71
    %v253 = vunpack.c.h.b16 %v71
    %v254 = vunpack.c.l.b16 %v72
    %v255 = vunpack.c.h.b16 %v72
    %v256 = vunpack.c.l.b16 %v73
    %v257 = vunpack.c.h.b16 %v73
    %v258 = vunpack.c.l.b16 %v74
    %v259 = vunpack.c.h.b16 %v74
    %v260 = vunpack.c.l.b16 %v75
    %v261 = vunpack.c.h.b16 %v75
    %v262 = vunpack.c.l.b16 %v76
    %v263 = vunpack.c.h.b16 %v76
    %v264 = vunpack.c.l.b16 %v77
    %v265 = vunpack.c.h.b16 %v77
    %v266 = vunpack.c.l.b16 %v78
    %v267 = vunpack.c.h.b16 %v78
    %v268 = vunpack.c.l.b16 %v79
    %v269 = vunpack.c.h.b16 %v79
    %v270 = vunpack.c.l.b16 %v80
    %v271 = vunpack.c.h.b16 %v80
    %v272 = vunpack.c.l.b16 %v81
    %v273 = vunpack.c.h.b16 %v81
    %v274 = vunpack.c.l.b16 %v82
    %v275 = vunpack.c.h.b16 %v82
    %v276 = vunpack.c.l.b16 %v83
    %v277 = vunpack.c.h.b16 %v83
    %v278 = vunpack.c.l.b16 %v84
    %v279 = vunpack.c.h.b16 %v84
    %v280 = vunpack.c.l.b16 %v85
    %v281 = vunpack.c.h.b16 %v85
    %v282 = vunpack.c.l.b16 %v86
    %v283 = vunpack.c.h.b16 %v86
    %v284 = vunpack.c.l.b16 %v87
    %v285 = vunpack.c.h.b16 %v87
    %v286 = vunpack.c.l.b16 %v88
    %v287 = vunpack.c.h.b16 %v88
    %v288 = vunpack.c.l.b16 %v89
    %v289 = vunpack.c.h.b16 %v89
    %v290 = vunpack.c.l.b16 %v90
    %v291 = vunpack.c.h.b16 %v90
    %v292 = vunpack.c.l.b16 %v91
    %v293 = vunpack.c.h.b16 %v91
    %v294 = vunpack.c.l.b16 %v92
    %v295 = vunpack.c.h.b16 %v92
    %v296 = vunpack.c.l.b16 %v93
    %v297 = vunpack.c.h.b16 %v93
    %v298 = vunpack.c.l.b16 %v94
    %v299 = vunpack.c.h.b16 %v94
    %v300 = vunpack.c.l.b16 %v95
    %v301 = vunpack.c.h.b16 %v95
    %v302 = vunpack.c.l.b16 %v96
    %v303 = vunpack.c.h.b16 %v96
    %v304 = vunpack.c.l.b16 %v97
    %v305 = vunpack.c.h.b16 %v97
    %v306 = vunpack.c.l.b16 %v98
    %v307 = vunpack.c.h.b16 %v98
    %v308 = vunpack.c.l.b16 %v99
    %v309 = vunpack.c.h.b16 %v99
    %v310 = vunpack.c.l.b16 %v100
    %v311 = vunpack.c.h.b16 %v100
    %v312 = vunpack.c.l.b16 %v101
    %v313 = vunpack.c.h.b16 %v101
    %v314 = vunpack.c.l.b16 %v102
    %v315 = vunpack.c.h.b16 %v102
    %v316 = vunpack.c.l.b16 %v103
    %v317 = vunpack.c.h.b16 %v103
    %v318 = vunpack.c.l.b16 %v104
    %v319 = vunpack.c.h.b16 %v104
    %v320 = vunpack.c.l.b16 %v105
    %v321 = vunpack.c.h.b16 %v105
    %v322 = vunpack.c.l.b16 %v106
    %v323 = vunpack.c.h.b16 %v106
    %v324 = vunpack.c.l.b16 %v107
    %v325 = vunpack.c.h.b16 %v107
    %v326 = vunpack.c.l.b16 %v108
    %v327 = vunpack.c.h.b16 %v108
    %v328 = vunpack.c.l.b16 %v109
    %v329 = vunpack.c.h.b16 %v109
    %v330 = vpack.c.b16 %v210, %v202
    %v331 = vpack.c.b16 %v211, %v203
    %v332 = vpack.c.b16 %v212, %v204
    %v333 = vpack.c.b16 %v213, %v205
    %v334 = vpack.c.b16 %v214, %v206
    %v335 = vpack.c.b16 %v215, %v207
    %v336 = vpack.c.b16 %v216, %v208
    %v337 = vpack.c.b16 %v217, %v209
    %v338 = vpack.c.b16 %v226, %v218
    %v339 = vpack.c.b16 %v227, %v219
    %v340 = vpack.c.b16 %v228, %v220
    %v341 = vpack.c.b16 %v229, %v221
    %v342 = vpack.c.b16 %v230, %v222
    %v343 = vpack.c.b16 %v231, %v223
    %v344 = vpack.c.b16 %v232, %v224
    %v345 = vpack.c.b16 %v233, %v225
    %v346 = vpack.c.b16 %v242, %v234
    %v347 = vpack.c.b16 %v243, %v235
    %v348 = vpack.c.b16 %v244, %v236
    %v349 = vpack.c.b16 %v245, %v237
    %v350 = vpack.c.b16 %v246, %v238
    %v351 = vpack.c.b16 %v247, %v239
    %v352 = vpack.c.b16 %v248, %v240
    %v353 = vpack.c.b16 %v249, %v241
    %v354 = vpack.c.b16 %v258, %v250
    %v355 = vpack.c.b16 %v259, %v251
    %v356 = vpack.c.b16 %v260, %v252
    %v357 = vpack.c.b16 %v261, %v253
    %v358 = vpack.c.b16 %v262, %v254
    %v359 = vpack.c.b16 %v263, %v255
    %v360 = vpack.c.b16 %v264, %v256
    %v361 = vpack.c.b16 %v265, %v257
    %v362 = vpack.c.b16 %v274, %v266
    %v363 = vpack.c.b16 %v275, %v267
    %v364 = vpack.c.b16 %v276, %v268
    %v365 = vpack.c.b16 %v277, %v269
    %v366 = vpack.c.b16 %v278, %v270
    %v367 = vpack.c.b16 %v279, %v271
    %v368 = vpack.c.b16 %v280, %v272
    %v369 = vpack.c.b16 %v281, %v273
    %v370 = vpack.c.b16 %v290, %v282
    %v371 = vpack.c.b16 %v291, %v283
    %v372 = vpack.c.b16 %v292, %v284
    %v373 = vpack.c.b16 %v293, %v285
    %v374 = vpack.c.b16 %v294, %v286
    %v375 = vpack.c.b16 %v295, %v287
    %v376 = vpack.c.b16 %v296, %v288
    %v377 = vpack.c.b16 %v297, %v289
    %v378 = vpack.c.b16 %v306, %v298
    %v379 = vpack.c.b16 %v307, %v299
    %v380 = vpack.c.b16 %v308, %v300
    %v381 = vpack.c.b16 %v309, %v301
    %v382 = vpack.c.b16 %v310, %v302
    %v383 = vpack.c.b16 %v311, %v303
    %v384 = vpack.c.b16 %v312, %v304
    %v385 = vpack.c.b16 %v313, %v305
    %v386 = vpack.c.b16 %v322, %v314
    %v387 = vpack.c.b16 %v323, %v315
    %v388 = vpack.c.b16 %v324, %v316
    %v389 = vpack.c.b16 %v325, %v317
    %v390 = vpack.c.b16 %v326, %v318
    %v391 = vpack.c.b16 %v327, %v319
    %v392 = vpack.c.b16 %v328, %v320
    %v393 = vpack.c.b16 %v329, %v321
    %458 = vmatprep.subr.bf16.mxu0 %v387
    %459 = vmatpush1.bf16.xpose.msra.mxu0 %v386
    %460 = vmatprep.subr.bf16.mxu0 %v379
    %461 = vmatpush1.bf16.xpose.msra.mxu0 %v378
    %462 = vmatprep.subr.bf16.mxu0 %v371
    %463 = vmatpush1.bf16.xpose.msra.mxu0 %v370
    %464 = vmatprep.subr.bf16.mxu0 %v363
    %465 = vmatpush1.bf16.xpose.msra.mxu0 %v362
    %466 = vmatprep.subr.bf16.mxu0 %v355
    %467 = vmatpush1.bf16.xpose.msra.mxu0 %v354
    %468 = vmatprep.subr.bf16.mxu0 %v347
    %469 = vmatpush1.bf16.xpose.msra.mxu0 %v346
    %470 = vmatprep.subr.bf16.mxu0 %v339
    %471 = vmatpush1.bf16.xpose.msra.mxu0 %v338
    %472 = vmatprep.subr.bf16.mxu0 %v331
    %473 = vmatpush1.bf16.xpose.msra.mxu0 %v330
    %474 = vmatprep.subr.bf16.mxu0 0
    %475 = vmatpush2.bf16.xpose.msra.mxu0 0
    %476 = vmatprep.subr.bf16.mxu0 0
    %477 = vmatpush2.bf16.xpose.msra.mxu0 0
    %478 = vmatprep.subr.bf16.mxu0 0
    %479 = vmatpush2.bf16.xpose.msra.mxu0 0
    %480 = vmatprep.subr.bf16.mxu0 0
    %481 = vmatpush2.bf16.xpose.msra.mxu0 0
    %482 = vmatprep.subr.bf16.mxu0 0
    %483 = vmatpush2.bf16.xpose.msra.mxu0 0
    %484 = vmatprep.subr.bf16.mxu0 0
    %485 = vmatpush2.bf16.xpose.msra.mxu0 0
    %486 = vmatprep.subr.bf16.mxu0 0
    %487 = vmatpush2.bf16.xpose.msra.mxu0 0
    %488 = vmatprep.subr.bf16.mxu0 0
    %489 = vmatpush2.bf16.xpose.msra.mxu0 0
    %490 = vmatprep.mubr.bf16.mxu0 %v123
    %491 = vmatmul.mubr.bf16.gmra.mxu0 %v122
    %v492 = vpop.f32.mrf.mxu0
    %v493 = vadd.f32 0.0, %v492
    %v494 = vpop.f32.mrf.mxu0
    %v495 = vpop.f32.mrf.mxu0
    %v496 = vpop.f32.mrf.mxu0
    %497 = vdwg.mxu0
    %498 = vmatprep.subr.bf16.mxu0 %v389
    %499 = vmatpush1.bf16.xpose.msra.mxu0 %v388
    %500 = vmatprep.subr.bf16.mxu0 %v381
    %501 = vmatpush1.bf16.xpose.msra.mxu0 %v380
    %502 = vmatprep.subr.bf16.mxu0 %v373
    %503 = vmatpush1.bf16.xpose.msra.mxu0 %v372
    %504 = vmatprep.subr.bf16.mxu0 %v365
    %505 = vmatpush1.bf16.xpose.msra.mxu0 %v364
    %506 = vmatprep.subr.bf16.mxu0 %v357
    %507 = vmatpush1.bf16.xpose.msra.mxu0 %v356
    %508 = vmatprep.subr.bf16.mxu0 %v349
    %509 = vmatpush1.bf16.xpose.msra.mxu0 %v348
    %510 = vmatprep.subr.bf16.mxu0 %v341
    %511 = vmatpush1.bf16.xpose.msra.mxu0 %v340
    %512 = vmatprep.subr.bf16.mxu0 %v333
    %513 = vmatpush1.bf16.xpose.msra.mxu0 %v332
    %514 = vmatprep.subr.bf16.mxu0 0
    %515 = vmatpush2.bf16.xpose.msra.mxu0 0
    %516 = vmatprep.subr.bf16.mxu0 0
    %517 = vmatpush2.bf16.xpose.msra.mxu0 0
    %518 = vmatprep.subr.bf16.mxu0 0
    %519 = vmatpush2.bf16.xpose.msra.mxu0 0
    %520 = vmatprep.subr.bf16.mxu0 0
    %521 = vmatpush2.bf16.xpose.msra.mxu0 0
    %522 = vmatprep.subr.bf16.mxu0 0
    %523 = vmatpush2.bf16.xpose.msra.mxu0 0
    %524 = vmatprep.subr.bf16.mxu0 0
    %525 = vmatpush2.bf16.xpose.msra.mxu0 0
    %526 = vmatprep.subr.bf16.mxu0 0
    %527 = vmatpush2.bf16.xpose.msra.mxu0 0
    %528 = vmatprep.subr.bf16.mxu0 0
    %529 = vmatpush2.bf16.xpose.msra.mxu0 0
    %530 = vmatprep.mubr.bf16.mxu0 %v125
    %531 = vmatmul.mubr.bf16.gmra.mxu0 %v124
    %v532 = vpop.f32.mrf.mxu0
    %v533 = vadd.f32 %v493, %v532
    %v534 = vpop.f32.mrf.mxu0
    %v535 = vpop.f32.mrf.mxu0
    %v536 = vpop.f32.mrf.mxu0
    %537 = vdwg.mxu0
    %538 = vmatprep.subr.bf16.mxu0 %v391
    %539 = vmatpush1.bf16.xpose.msra.mxu0 %v390
    %540 = vmatprep.subr.bf16.mxu0 %v383
    %541 = vmatpush1.bf16.xpose.msra.mxu0 %v382
    %542 = vmatprep.subr.bf16.mxu0 %v375
    %543 = vmatpush1.bf16.xpose.msra.mxu0 %v374
    %544 = vmatprep.subr.bf16.mxu0 %v367
    %545 = vmatpush1.bf16.xpose.msra.mxu0 %v366
    %546 = vmatprep.subr.bf16.mxu0 %v359
    %547 = vmatpush1.bf16.xpose.msra.mxu0 %v358
    %548 = vmatprep.subr.bf16.mxu0 %v351
    %549 = vmatpush1.bf16.xpose.msra.mxu0 %v350
    %550 = vmatprep.subr.bf16.mxu0 %v343
    %551 = vmatpush1.bf16.xpose.msra.mxu0 %v342
    %552 = vmatprep.subr.bf16.mxu0 %v335
    %553 = vmatpush1.bf16.xpose.msra.mxu0 %v334
    %554 = vmatprep.subr.bf16.mxu0 0
    %555 = vmatpush2.bf16.xpose.msra.mxu0 0
    %556 = vmatprep.subr.bf16.mxu0 0
    %557 = vmatpush2.bf16.xpose.msra.mxu0 0
    %558 = vmatprep.subr.bf16.mxu0 0
    %559 = vmatpush2.bf16.xpose.msra.mxu0 0
    %560 = vmatprep.subr.bf16.mxu0 0
    %561 = vmatpush2.bf16.xpose.msra.mxu0 0
    %562 = vmatprep.subr.bf16.mxu0 0
    %563 = vmatpush2.bf16.xpose.msra.mxu0 0
    %564 = vmatprep.subr.bf16.mxu0 0
    %565 = vmatpush2.bf16.xpose.msra.mxu0 0
    %566 = vmatprep.subr.bf16.mxu0 0
    %567 = vmatpush2.bf16.xpose.msra.mxu0 0
    %568 = vmatprep.subr.bf16.mxu0 0
    %569 = vmatpush2.bf16.xpose.msra.mxu0 0
    %570 = vmatprep.mubr.bf16.mxu0 %v127
    %571 = vmatmul.mubr.bf16.gmra.mxu0 %v126
    %v572 = vpop.f32.mrf.mxu0
    %v573 = vadd.f32 %v533, %v572
    %v574 = vpop.f32.mrf.mxu0
    %v575 = vpop.f32.mrf.mxu0
    %v576 = vpop.f32.mrf.mxu0
    %577 = vdwg.mxu0
    %578 = vmatprep.subr.bf16.mxu0 %v393
    %579 = vmatpush1.bf16.xpose.msra.mxu0 %v392
    %580 = vmatprep.subr.bf16.mxu0 %v385
    %581 = vmatpush1.bf16.xpose.msra.mxu0 %v384
    %582 = vmatprep.subr.bf16.mxu0 %v377
    %583 = vmatpush1.bf16.xpose.msra.mxu0 %v376
    %584 = vmatprep.subr.bf16.mxu0 %v369
    %585 = vmatpush1.bf16.xpose.msra.mxu0 %v368
    %586 = vmatprep.subr.bf16.mxu0 %v361
    %587 = vmatpush1.bf16.xpose.msra.mxu0 %v360
    %588 = vmatprep.subr.bf16.mxu0 %v353
    %589 = vmatpush1.bf16.xpose.msra.mxu0 %v352
    %590 = vmatprep.subr.bf16.mxu0 %v345
    %591 = vmatpush1.bf16.xpose.msra.mxu0 %v344
    %592 = vmatprep.subr.bf16.mxu0 %v337
    %593 = vmatpush1.bf16.xpose.msra.mxu0 %v336
    %594 = vmatprep.subr.bf16.mxu0 0
    %595 = vmatpush2.bf16.xpose.msra.mxu0 0
    %596 = vmatprep.subr.bf16.mxu0 0
    %597 = vmatpush2.bf16.xpose.msra.mxu0 0
    %598 = vmatprep.subr.bf16.mxu0 0
    %599 = vmatpush2.bf16.xpose.msra.mxu0 0
    %600 = vmatprep.subr.bf16.mxu0 0
    %601 = vmatpush2.bf16.xpose.msra.mxu0 0
    %602 = vmatprep.subr.bf16.mxu0 0
    %603 = vmatpush2.bf16.xpose.msra.mxu0 0
    %604 = vmatprep.subr.bf16.mxu0 0
    %605 = vmatpush2.bf16.xpose.msra.mxu0 0
    %606 = vmatprep.subr.bf16.mxu0 0
    %607 = vmatpush2.bf16.xpose.msra.mxu0 0
    %608 = vmatprep.subr.bf16.mxu0 0
    %609 = vmatpush2.bf16.xpose.msra.mxu0 0
    %610 = vmatprep.mubr.bf16.mxu0 %v129
    %611 = vmatmul.mubr.bf16.gmra.mxu0 %v128
    %v612 = vpop.f32.mrf.mxu0
    %v613 = vadd.f32 %v573, %v612
    %v614 = vpop.f32.mrf.mxu0
    %v615 = vpop.f32.mrf.mxu0
    %v616 = vpop.f32.mrf.mxu0
    %617 = vdwg.mxu0
    %p618 = scmp.eq.s32.totalorder 0, 0
    // Predicated region
    $region22: #{tpu_custom_call.1} parent=1 // pred_check
      %p619 = pneg %p618
    $region23: #{tpu_custom_call.1} parent=1 // pred_check_branch
      %621 = sbr.rel (%p619) target = $region25
    $region24: #{tpu_custom_call.1} parent=1 // pred_region
      %v622 = vld [vmem:[%s2] sm:$0x1]
      %v624 = vlaneseq
      %v625 = vshrl.u32 %v624, 7
      %v626 = vsub.s32 0, %v625
      %v627 = vrot.slane %v622, %v626
      %v629 = vadd.f32 %v613, %v627
      %630 = vst [vmem:[#allocation7] sm:$0xff] %v629
    $region25: #{tpu_custom_call.1} parent=1 // pred_fallthru
      _
    %p631 = scmp.gt.s32.totalorder 0, 0
    // Predicated region
    $region26: #{tpu_custom_call.1} parent=1 // pred_check
      %p632 = pneg %p631
    $region27: #{tpu_custom_call.1} parent=1 // pred_check_branch
      %634 = sbr.rel (%p632) target = $region29
    $region28: #{tpu_custom_call.1} parent=1 // pred_region
      %v635 = vld [vmem:[#allocation7] sm:$0xff]
      %v636 = vadd.f32 %v635, %v613
      %637 = vst [vmem:[#allocation7] sm:$0xff] %v636
    $region29: #{tpu_custom_call.1} parent=1 // pred_fallthru
      _
    // Predicated region
    $region30: #{tpu_custom_call.1} parent=1 // pred_check
      _
    $region31: #{tpu_custom_call.1} parent=1 // pred_check_branch
      %639 = sbr.rel (0) target = $region33
    $region32: #{tpu_custom_call.1} parent=1 // pred_region
      %s641 = ssub.s32 128, 128
      %642 = vsyncadd [#allocation4], %s641
      %s644 = sshll.u32 [#allocation7], 4
      %s645 = int_to_ptr.vmem [resolvable:$true] %s644
      %647 = dma.vmem_to_hbm [thread:$0]  %s645, 128, %s3, [#allocation4]
    $region33: #{tpu_custom_call.1} parent=1 // pred_fallthru
      _
    // Predicated region
    $region34: #{tpu_custom_call.1} parent=1 // pred_check
      _
    $region35: #{tpu_custom_call.1} parent=1 // pred_check_branch
      %649 = sbr.rel (0) target = $region37
    $region36: #{tpu_custom_call.1} parent=1 // pred_region
      %650 = dma.done [#allocation4], 128
    $region37: #{tpu_custom_call.1} parent=1 // pred_fallthru
      _
    %651 = vsyncpa [#allocation3], 1
    %652 = vsyncpa [#allocation6], 1
    %653 = vsyncpa [#allocation4], 1

</llo_original>
